<compile_context>
chip_gen: v7x
topology: tpu7x:2x2x1
jax: 0.10.0
libtpu: 0.0.40
codegen_flags: <defaults>
</compile_context>

<pallas_src>
import jax
import jax.numpy as jnp
from jax.experimental import pallas as pl
from jax.experimental.pallas import tpu as pltpu


def se_kernel(x_ref, w1t_ref, w2t_ref, o_ref):
    # x_ref: (Bt, C, HWp)  w1t_ref: (C, Cr) (pre-scaled by 1/HW)
    # w2t_ref: (Cr, C)     o_ref: (Bt, C, HWp)
    x = x_ref[...]                                           # keep input dtype

    # --- squeeze: sum over (padded) spatial dims; mean scale folded into w1t ---
    y = jnp.sum(x.astype(jnp.float32), axis=-1)              # (Bt, C)

    # --- excitation MLP: Linear -> ReLU -> Linear -> Sigmoid (f32 throughout) ---
    h = jnp.dot(y, w1t_ref[...], preferred_element_type=jnp.float32)   # (Bt, Cr)
    h = jnp.maximum(h, 0.0)
    s = jnp.dot(h, w2t_ref[...], preferred_element_type=jnp.float32)   # (Bt, C)
    s = jax.nn.sigmoid(s)

    # --- scale: broadcast over spatial dims (no full-block upcast) ---
    o_ref[...] = (x * s[:, :, None].astype(x.dtype)).astype(o_ref.dtype)


# Conservative pipeline budget for the double-buffered x blocks:
#   2 x (input block) + 2 x (output block) = 4 * Bt*C*HWp*itemsize.
# 16 MiB fits the scoped-VMEM defaults of v5e (16 MiB) and leaves plenty of
# headroom on v6e/v7x (32 MiB scoped, 128/64 MiB physical).
_PIPELINE_BUDGET_BYTES = 16 * 1024 * 1024


def _pick_bt(b, c, hw_pad, itemsize):
    """Largest batch-tile that (a) divides B, (b) fits the VMEM pipeline budget,
    and (c) preferably leaves >= 2 grid steps so both v7x TensorCores get work."""
    per_batch = 4 * c * hw_pad * itemsize
    max_bt = max(1, _PIPELINE_BUDGET_BYTES // max(1, per_batch))
    divisors = [d for d in range(1, b + 1) if b % d == 0]
    feasible = [d for d in divisors if d <= max_bt] or [1]
    preferred = [d for d in feasible if b // d >= 2]
    return max(preferred) if preferred else max(feasible)


def se_layer(x, w1, w2):
    """x: (B, C, H, W); w1: (C//r, C); w2: (C, C//r) (PyTorch Linear layout, bias=False)."""
    b, c, h, w = x.shape
    hw = h * w
    cr = w1.shape[0]
    itemsize = jnp.dtype(x.dtype).itemsize

    # Flatten spatial dims; pad HW up to a multiple of 128 for lane-dense
    # loads/stores. Padded lanes are zero, so the squeeze sum is unaffected.
    hw_pad = ((hw + 127) // 128) * 128
    x_flat = x.reshape(b, c, hw)
    if hw_pad != hw:
        x_flat = jnp.pad(x_flat, ((0, 0), (0, 0), (0, hw_pad - hw)))

    # Fold the 1/HW mean into W1 (host-side, once per call) and pre-transpose
    # both weights to the kernel's (in, out) layout.
    w1t = (w1.T / jnp.asarray(hw, w1.dtype)).astype(jnp.float32)   # (C, Cr)
    w2t = w2.T.astype(jnp.float32)                                  # (Cr, C)

    bt = _pick_bt(b, c, hw_pad, itemsize)
    grid = (b // bt,)

    # Explicit VMEM limit sized to the blocks (capped safely below v7x's
    # 64 MiB physical VMEM).
    block_bytes = bt * c * hw_pad * itemsize
    weight_bytes = (c * cr + cr * c) * 4
    needed = 4 * block_bytes + 2 * weight_bytes + (2 << 20)
    vmem_limit = int(min(max(needed, 32 * 1024 * 1024), 48 * 1024 * 1024))

    # TODO(synk): for single-image feature maps so large that even Bt=1 exceeds
    # VMEM (huge HW), fall back to a two-phase grid over HW chunks with a
    # per-channel accumulator; not needed for standard SE-block shapes.

    out_flat = pl.pallas_call(
        se_kernel,
        out_shape=jax.ShapeDtypeStruct((b, c, hw_pad), x.dtype),
        grid_spec=pltpu.PrefetchScalarGridSpec(
            num_scalar_prefetch=0,
            grid=grid,
            in_specs=[
                pl.BlockSpec((bt, c, hw_pad), lambda i: (i, 0, 0)),
                pl.BlockSpec((c, cr), lambda i: (0, 0)),
                pl.BlockSpec((cr, c), lambda i: (0, 0)),
            ],
            out_specs=pl.BlockSpec((bt, c, hw_pad), lambda i: (i, 0, 0)),
        ),
        compiler_params=pltpu.CompilerParams(
            dimension_semantics=("parallel",),
            vmem_limit_bytes=vmem_limit,
        ),
    )(x_flat, w1t, w2t)

    if hw_pad != hw:
        out_flat = out_flat[:, :, :hw]
    return out_flat.reshape(b, c, h, w)


def se_layer_ref(x, w1, w2):
    """Pure-JAX reference mirroring the PyTorch forward."""
    y = jnp.mean(x, axis=(2, 3))                 # (B, C)
    y = jnp.maximum(y @ w1.T, 0.0)               # (B, C//r)
    y = jax.nn.sigmoid(y @ w2.T)                 # (B, C)
    return x * y[:, :, None, None]


if __name__ == "__main__":
    key = jax.random.PRNGKey(0)
    k_x, k_w1, k_w2 = jax.random.split(key, 3)

    # channel must be divisible by reduction=8
    B, C, H, W = 2, 16, 16, 16
    reduction = 8
    Cr = C // reduction

    x = jax.random.normal(k_x, (B, C, H, W), dtype=jnp.float32)
    # Deterministic init mimicking nn.Linear default (uniform, bias=False).
    bound1 = 1.0 / (C ** 0.5)
    bound2 = 1.0 / (Cr ** 0.5)
    w1 = jax.random.uniform(k_w1, (Cr, C), jnp.float32, -bound1, bound1)  # Linear(C, C//r)
    w2 = jax.random.uniform(k_w2, (C, Cr), jnp.float32, -bound2, bound2)  # Linear(C//r, C)

    out = se_layer(x, w1, w2)
    out = jax.block_until_ready(out)

    ref = se_layer_ref(x, w1, w2)
    assert out.shape == (B, C, H, W)
    assert jnp.allclose(out, ref, atol=1e-5, rtol=1e-5), "mismatch vs reference"

    print("KERNEL_OK")
</pallas_src>

<mosaic_0001>
module attributes {stable_mosaic.version = 11 : i64} {
  func.func @se_kernel(%arg0: i32, %arg1: memref<1x16x256xf32, #tpu.memory_space<vmem>>, %arg2: memref<16x2xf32, #tpu.memory_space<vmem>>, %arg3: memref<2x16xf32, #tpu.memory_space<vmem>>, %arg4: memref<1x16x256xf32, #tpu.memory_space<vmem>>) attributes {dimension_semantics = [#tpu.dimension_semantics<parallel>], iteration_bounds = array<i64: 2>, scalar_prefetch = 0 : i64, scratch_operands = 0 : i64, tpu.core_type = #tpu.core_type<tc>, window_params = [{transform_indices = @transform_0, window_bounds = array<i64: 1, 16, 256>}, {pipeline_mode = #tpu.pipeline_mode<synchronous>, transform_indices = @transform_1, window_bounds = array<i64: 16, 2>}, {pipeline_mode = #tpu.pipeline_mode<synchronous>, transform_indices = @transform_2, window_bounds = array<i64: 2, 16>}, {transform_indices = @transform_3, window_bounds = array<i64: 1, 16, 256>}]} {
    %c0 = arith.constant 0 : index
    %c0_0 = arith.constant 0 : index
    %c0_1 = arith.constant 0 : index
    %0 = vector.load %arg1[%c0, %c0_0, %c0_1] : memref<1x16x256xf32, #tpu.memory_space<vmem>>, vector<1x16x256xf32>
    %cst = arith.constant dense<0.000000e+00> : vector<1x16xf32>
    %1 = vector.multi_reduction <add>, %0, %cst [2] : vector<1x16x256xf32> to vector<1x16xf32>
    %c0_2 = arith.constant 0 : index
    %c0_3 = arith.constant 0 : index
    %2 = vector.load %arg2[%c0_2, %c0_3] : memref<16x2xf32, #tpu.memory_space<vmem>>, vector<16x2xf32>
    %cst_4 = arith.constant dense<0.000000e+00> : vector<1x2xf32>
    %3 = tpu.matmul %1, %2, %cst_4 {dimension_numbers = #tpu.dot_dimension_numbers<[1], [0], [0], [1], [0, 0, 1, 1], [], []>} : vector<1x16xf32>, vector<16x2xf32>, vector<1x2xf32> -> vector<1x2xf32>
    %cst_5 = arith.constant 0.000000e+00 : f32
    %4 = vector.broadcast %cst_5 : f32 to vector<1x2xf32>
    %5 = arith.maximumf %3, %4 : vector<1x2xf32>
    %c0_6 = arith.constant 0 : index
    %c0_7 = arith.constant 0 : index
    %6 = vector.load %arg3[%c0_6, %c0_7] : memref<2x16xf32, #tpu.memory_space<vmem>>, vector<2x16xf32>
    %cst_8 = arith.constant dense<0.000000e+00> : vector<1x16xf32>
    %7 = tpu.matmul %5, %6, %cst_8 {dimension_numbers = #tpu.dot_dimension_numbers<[1], [0], [0], [1], [0, 0, 1, 1], [], []>} : vector<1x2xf32>, vector<2x16xf32>, vector<1x16xf32> -> vector<1x16xf32>
    %8 = arith.negf %7 : vector<1x16xf32>
    %9 = math.exp %8 : vector<1x16xf32>
    %cst_9 = arith.constant 1.000000e+00 : f32
    %10 = vector.broadcast %cst_9 : f32 to vector<1x16xf32>
    %11 = arith.addf %10, %9 : vector<1x16xf32>
    %12 = arith.divf %10, %11 : vector<1x16xf32>
    %13 = vector.shape_cast %12 : vector<1x16xf32> to vector<1x16x1xf32>
    %14 = vector.broadcast %13 : vector<1x16x1xf32> to vector<1x16x256xf32>
    %15 = arith.mulf %0, %14 : vector<1x16x256xf32>
    %c0_10 = arith.constant 0 : index
    %c0_11 = arith.constant 0 : index
    %c0_12 = arith.constant 0 : index
    %16 = vector.load %arg4[%c0_10, %c0_11, %c0_12] : memref<1x16x256xf32, #tpu.memory_space<vmem>>, vector<1x16x256xf32>
    tpu.vector_store %arg4[%c0_10, %c0_11, %c0_12], %15 {strides = array<i32>} : memref<1x16x256xf32, #tpu.memory_space<vmem>>, vector<1x16x256xf32>,
    return
  }
  func.func @transform_0(%arg0: i32) -> (i32, i32, i32) {
    %c0_i32 = arith.constant 0 : i32
    %c0_i32_0 = arith.constant 0 : i32
    %c0_i32_1 = arith.constant 0 : i32
    return %arg0, %c0_i32, %c0_i32_0 : i32, i32, i32
  }
  func.func @transform_1(%arg0: i32) -> (i32, i32) {
    %c0_i32 = arith.constant 0 : i32
    %c0_i32_0 = arith.constant 0 : i32
    %c0_i32_1 = arith.constant 0 : i32
    return %c0_i32, %c0_i32_0 : i32, i32
  }
  func.func @transform_2(%arg0: i32) -> (i32, i32) {
    %c0_i32 = arith.constant 0 : i32
    %c0_i32_0 = arith.constant 0 : i32
    %c0_i32_1 = arith.constant 0 : i32
    return %c0_i32, %c0_i32_0 : i32, i32
  }
  func.func @transform_3(%arg0: i32) -> (i32, i32, i32) {
    %c0_i32 = arith.constant 0 : i32
    %c0_i32_0 = arith.constant 0 : i32
    %c0_i32_1 = arith.constant 0 : i32
    return %arg0, %c0_i32, %c0_i32_0 : i32, i32, i32
  }
}

</mosaic_0001>

<llo_original>
// kernel: tpu_custom_call.1
$region0: #{tpu_custom_call.1}
  #allocation0 [shape = 'u32[]', space=smem, size = 0x4, offset = 0x4, fixed_abs, tag = 'smem constant byte address 0x4 - core index']
  #allocation1 [shape = 'u32[144,128]{1,0:T(1,128)}', space=vmem, size = 0x12000, scoped, tag = 'internal scratch']
  %s0 = inlined_call_operand.hbm [shape: f32[2,16,256], index: 0, kind: input, shape index: {}]
  %s1 = inlined_call_operand.vmem [shape: f32[16,2], index: 1, kind: input, shape index: {}]
  %s2 = inlined_call_operand.vmem [shape: f32[2,16], index: 2, kind: input, shape index: {}]
  %s3 = inlined_call_operand.hbm [shape: f32[2,16,256], index: 3, kind: output, shape index: {}]
  %s4 = sld [smem:[#allocation0]]
  $region49: #{tpu_custom_call.1} parent=0
    _
  %s6 = ssub.s32 1, %s4
  %s7 = scalar_select 0, %s6, %s4
  $region1: #{tpu_custom_call.1} parent=0
    #allocation2 [shape = 'u8[32768]{0}', space=vmem, size = 0x8000, scoped, tag = 'input window, operand 0']
    #allocation3 [shape = 's32[2]{0}', space=sflag, size = 0x8, scoped, tag = 'scoped memory for tpu_custom_call.1']
    #allocation4 [shape = 's32[2]{0}', space=sflag, size = 0x8, scoped, tag = 'scoped memory for tpu_custom_call.1']
    #allocation5 [shape = 'u8[32768]{0}', space=vmem, size = 0x8000, scoped, tag = 'output window, operand 0']
    %8 = vsyncpa [#allocation3], 0
    %s9 = scalar_lea.sflag [#allocation3], 1
    %10 = vsyncpa %s9, 0
    %11 = vsyncpa [#allocation4], 0
    %s12 = scalar_lea.sflag [#allocation4], 1
    %13 = vsyncpa %s12, 0
    loop: start=0, step=1, limit=4
    $region2: #{tpu_custom_call.1} parent=1 // loop_pre_header
      _
    $region3: #{tpu_custom_call.1} parent=1 // loop_header
      %s15 = sphi 0, %s19
      %p16 = scmp.ge.s32.totalorder %s15, 4
      %s25 = sphi 0, %s27
      %s28 = sphi 0, %s25
      %s29 = sphi 0, %s28
      %s45 = sphi 0, %s29
      %s49 = sphi 0, %s49
      %s51 = sphi 0, %s49
      %s52 = sphi 0, %s51
      %s66 = sphi 0, %s52
      %s70 = sphi 0, %s70
      %s72 = sphi 0, %s70
      %s73 = sphi 0, %s72
      %s87 = sphi 0, %s73
      %s93 = sphi 0, %s95
      %s96 = sphi 0, %s93
      %s97 = sphi 0, %s96
      %s113 = sphi 0, %s97
    $region4: #{tpu_custom_call.1} parent=1 // loop_header_branch
      %18 = sbr.rel (%p16) target = $region8
    $region5: #{tpu_custom_call.1} parent=1 // loop_body
      %s20 = ssub.s32 %s15, 1
      %s21 = ssub.s32 %s15, 2
      %s22 = sadd.s32 %s15, 1
      %s23 = ssub.s32 %s15, %s22
      %p24 = scmp.eq.s32.totalorder %s23, 0
      %s26 = sadd.s32 %s25, 1
      %s27 = scalar_select %p24, %s25, %s26
      %p30 = pneg %p24
      %p31 = scmp.eq.s32.totalorder %s15, 1
      %p32 = por %p30, %p31
      %p33 = scmp.ne.s32.totalorder %s25, %s28
      %p34 = scmp.eq.s32.totalorder %s15, 0
      %p35 = por %p33, %p34
      %p36 = scmp.ne.s32.totalorder %s25, %s28
      %p37 = scmp.eq.s32.totalorder %s20, 1
      %p38 = por %p36, %p37
      %p39 = scmp.ne.s32.totalorder %s28, %s29
      %p40 = scmp.eq.s32.totalorder %s20, 0
      %p41 = por %p39, %p40
      %p42 = scmp.ne.s32.totalorder %s28, %s29
      %p43 = scmp.eq.s32.totalorder %s21, 1
      %p44 = por %p42, %p43
      %p46 = scmp.ne.s32.totalorder %s29, %s45
      %p47 = scmp.eq.s32.totalorder %s21, 0
      %p48 = por %p46, %p47
      %s50 = sadd.s32 %s49, 1
      %p53 = scmp.eq.s32.totalorder %s15, 1
      %p54 = scmp.ne.s32.totalorder %s49, %s51
      %p55 = scmp.eq.s32.totalorder %s15, 0
      %p56 = por %p54, %p55
      %p57 = scmp.ne.s32.totalorder %s49, %s51
      %p58 = scmp.eq.s32.totalorder %s20, 1
      %p59 = por %p57, %p58
      %p60 = scmp.ne.s32.totalorder %s51, %s52
      %p61 = scmp.eq.s32.totalorder %s20, 0
      %p62 = por %p60, %p61
      %p63 = scmp.ne.s32.totalorder %s51, %s52
      %p64 = scmp.eq.s32.totalorder %s21, 1
      %p65 = por %p63, %p64
      %p67 = scmp.ne.s32.totalorder %s52, %s66
      %p68 = scmp.eq.s32.totalorder %s21, 0
      %p69 = por %p67, %p68
      %s71 = sadd.s32 %s70, 1
      %p74 = scmp.eq.s32.totalorder %s15, 1
      %p75 = scmp.ne.s32.totalorder %s70, %s72
      %p76 = scmp.eq.s32.totalorder %s15, 0
      %p77 = por %p75, %p76
      %p78 = scmp.ne.s32.totalorder %s70, %s72
      %p79 = scmp.eq.s32.totalorder %s20, 1
      %p80 = por %p78, %p79
      %p81 = scmp.ne.s32.totalorder %s72, %s73
      %p82 = scmp.eq.s32.totalorder %s20, 0
      %p83 = por %p81, %p82
      %p84 = scmp.ne.s32.totalorder %s72, %s73
      %p85 = scmp.eq.s32.totalorder %s21, 1
      %p86 = por %p84, %p85
      %p88 = scmp.ne.s32.totalorder %s73, %s87
      %p89 = scmp.eq.s32.totalorder %s21, 0
      %p90 = por %p88, %p89
      %s91 = ssub.s32 %s15, %s22
      %p92 = scmp.eq.s32.totalorder %s91, 0
      %s94 = sadd.s32 %s93, 1
      %s95 = scalar_select %p92, %s93, %s94
      %p98 = pneg %p92
      %p99 = scmp.eq.s32.totalorder %s15, 1
      %p100 = por %p98, %p99
      %p101 = scmp.ne.s32.totalorder %s93, %s96
      %p102 = scmp.eq.s32.totalorder %s15, 0
      %p103 = por %p101, %p102
      %p104 = scmp.ne.s32.totalorder %s93, %s96
      %p105 = scmp.eq.s32.totalorder %s20, 1
      %p106 = por %p104, %p105
      %p107 = scmp.ne.s32.totalorder %s96, %s97
      %p108 = scmp.eq.s32.totalorder %s20, 0
      %p109 = por %p107, %p108
      %p110 = scmp.ne.s32.totalorder %s96, %s97
      %p111 = scmp.eq.s32.totalorder %s21, 1
      %p112 = por %p110, %p111
      %p114 = scmp.ne.s32.totalorder %s97, %s113
      %p115 = scmp.eq.s32.totalorder %s21, 0
      %p116 = por %p114, %p115
      %p117 = scmp.le.s32.totalorder 1, %s15
      %p118 = scmp.lt.s32.totalorder %s15, 3
      %p119 = pnand %p117, %p118
      %p120 = pneg %p119
      // Predicated region
      $region9: #{tpu_custom_call.1} parent=5 // pred_check
        _
      $region10: #{tpu_custom_call.1} parent=5 // pred_check_branch
        %122 = sbr.rel (%p119) target = $region12
      $region11: #{tpu_custom_call.1} parent=5 // pred_region
        %s123 = ssub.s32 %s15, 1
        // Predicated region
        $region13: #{tpu_custom_call.1} parent=11 // pred_check
          %p124 = pneg %p62
        $region14: #{tpu_custom_call.1} parent=11 // pred_check_branch
          %126 = sbr.rel (%p124) target = $region16
        $region15: #{tpu_custom_call.1} parent=11 // pred_region
          _
        $region16: #{tpu_custom_call.1} parent=11 // pred_fallthru
          _
        // Predicated region
        $region17: #{tpu_custom_call.1} parent=11 // pred_check
          %p127 = pneg %p83
        $region18: #{tpu_custom_call.1} parent=11 // pred_check_branch
          %129 = sbr.rel (%p127) target = $region20
        $region19: #{tpu_custom_call.1} parent=11 // pred_region
          _
        $region20: #{tpu_custom_call.1} parent=11 // pred_fallthru
          _
      $region12: #{tpu_custom_call.1} parent=5 // pred_fallthru
        _
      %p130 = scmp.lt.s32.totalorder %s15, 2
      // Predicated region
      $region21: #{tpu_custom_call.1} parent=5 // pred_check
        %p131 = pneg %p130
      $region22: #{tpu_custom_call.1} parent=5 // pred_check_branch
        %133 = sbr.rel (%p131) target = $region24
      $region23: #{tpu_custom_call.1} parent=5 // pred_region
        // Predicated region
        $region25: #{tpu_custom_call.1} parent=23 // pred_check
          %p134 = pneg %p35
        $region26: #{tpu_custom_call.1} parent=23 // pred_check_branch
          %136 = sbr.rel (%p134) target = $region28
        $region27: #{tpu_custom_call.1} parent=23 // pred_region
          %s137 = sand.u32 %s25, 1
          %s138 = scalar_lea.sflag [#allocation3], %s137
          %s139 = sand.u32 %s25, 1
          %s140 = smul.addr %s139, 32
          %s141 = scalar_lea.vmem [#allocation2], %s140
          %s143 = ssub.s32 512, 512
          %144 = vsyncadd %s138, %s143
          %s145 = smul.addr %s15, 4
          %s146 = smul.addr %s145, 128
          %s147 = scalar_lea.hbm %s0, %s146
          %s148 = sshll.u32 %s141, 4
          %s149 = int_to_ptr.vmem [resolvable:$true] %s148
          %154 = dma.hbm_to_vmem [thread:$0]  %s147, 512, %s149, %s138, 256, 256, 16
        $region28: #{tpu_custom_call.1} parent=23 // pred_fallthru
          _
      $region24: #{tpu_custom_call.1} parent=5 // pred_fallthru
        _
      %p155 = scmp.le.s32.totalorder 1, %s15
      %p156 = scmp.lt.s32.totalorder %s15, 3
      %p157 = pnand %p155, %p156
      %p158 = pneg %p157
      // Predicated region
      $region29: #{tpu_custom_call.1} parent=5 // pred_check
        _
      $region30: #{tpu_custom_call.1} parent=5 // pred_check_branch
        %160 = sbr.rel (%p157) target = $region32
      $region31: #{tpu_custom_call.1} parent=5 // pred_region
        %s161 = ssub.s32 %s15, 1
        %s162 = sand.u32 %s28, 1
        %s163 = scalar_lea.sflag [#allocation3], %s162
        %s164 = sand.u32 %s28, 1
        %s165 = smul.addr %s164, 32
        %s166 = scalar_lea.vmem [#allocation2], %s165
        // Predicated region
        $region33: #{tpu_custom_call.1} parent=31 // pred_check
          %p167 = pneg %p41
        $region34: #{tpu_custom_call.1} parent=31 // pred_check_branch
          %169 = sbr.rel (%p167) target = $region36
        $region35: #{tpu_custom_call.1} parent=31 // pred_region
          %170 = dma.done %s163, 512
        $region36: #{tpu_custom_call.1} parent=31 // pred_fallthru
          _
        %s171 = sand.u32 %s28, 1
        %s172 = scalar_lea.sflag [#allocation3], %s171
        %s173 = sand.u32 %s28, 1
        %s174 = smul.addr %s173, 32
        %s175 = scalar_lea.vmem [#allocation2], %s174
        %p176 = pneg %p41
        %p177 = pneg %p38
        %p178 = pneg %p62
        %p179 = pneg %p59
        %p180 = pneg %p83
        %p181 = pneg %p80
        %p182 = pneg %p109
        %p183 = pneg %p106
        %s184 = sand.u32 %s96, 1
        %s185 = scalar_lea.sflag [#allocation4], %s184
        %s186 = sand.u32 %s96, 1
        %s187 = smul.addr %s186, 32
        %s188 = scalar_lea.vmem [#allocation5], %s187
        %v189 = vld [vmem:[%s166] sm:$0xff]
        %v190 = vld [vmem:[%s166 + $0x8] sm:$0xff]
        %v191 = vld [vmem:[%s166 + $0x10] sm:$0xff]
        %v192 = vld [vmem:[%s166 + $0x18] sm:$0xff]
        %v193 = vadd.f32 %v189, %v190
        %194 = vadd.xlane.f32.xlu0 %v193
        %v195 = vpop.xlane.xlu0 %194
        %v196 = vadd.f32 %v191, %v192
        %197 = vadd.xlane.f32.xlu0 %v196
        %v198 = vpop.xlane.xlu0 %197
        %v199 = vld [vmem:[%s1] sm:$0xff]
        %v200 = vld [vmem:[%s1 + $0x8] sm:$0xff]
        %v203 = vlaneseq
        %v204 = vand.u32 %v203, 127
        %v205 = vlaneseq
        %v206 = vshrl.u32 %v205, 7
        %v207 = vsub.s32 %v204, %v206
        %v208 = vrot.slane %v195, %v207
        %v209 = vadd.s32 %v204, 4294967288
        %v210 = vlaneseq
        %v211 = vshrl.u32 %v210, 7
        %v212 = vsub.s32 %v209, %v211
        %v213 = vrot.slane %v198, %v212
        %vm214 = vcmask 130112
        %v215 = vsel %vm214, %v213, %v208
        %vm216 = vcmask 130048
        %v217 = vsel %vm216, %v215, 0
        %219 = vmatprep.subr.mxu0 0.0
        %220 = vmatpush1.msra.mxu0 %v199
        %221 = vmatprep.subr.mxu0 0.0
        %222 = vmatpush1.msra.mxu0 %v200
        %223 = vmatprep.subr.mxu0 0.0
        %224 = vmatpush1.msra.mxu0 0.0
        %225 = vmatprep.subr.mxu0 0.0
        %226 = vmatpush1.msra.mxu0 0.0
        %227 = vmatprep.subr.mxu0 0.0
        %228 = vmatpush1.msra.mxu0 0.0
        %229 = vmatprep.subr.mxu0 0.0
        %230 = vmatpush1.msra.mxu0 0.0
        %231 = vmatprep.subr.mxu0 0.0
        %232 = vmatpush1.msra.mxu0 0.0
        %233 = vmatprep.subr.mxu0 0.0
        %234 = vmatpush1.msra.mxu0 0.0
        %235 = vmatprep.subr.mxu0 0.0
        %236 = vmatpush1.msra.mxu0 0.0
        %237 = vmatprep.subr.mxu0 0.0
        %238 = vmatpush1.msra.mxu0 0.0
        %239 = vmatprep.subr.mxu0 0.0
        %240 = vmatpush1.msra.mxu0 0.0
        %241 = vmatprep.subr.mxu0 0.0
        %242 = vmatpush1.msra.mxu0 0.0
        %243 = vmatprep.subr.mxu0 0.0
        %244 = vmatpush1.msra.mxu0 0.0
        %245 = vmatprep.subr.mxu0 0.0
        %246 = vmatpush1.msra.mxu0 0.0
        %247 = vmatprep.subr.mxu0 0.0
        %248 = vmatpush1.msra.mxu0 0.0
        %249 = vmatprep.subr.mxu0 0.0
        %250 = vmatpush1.msra.mxu0 0.0
        %251 = vmatprep.subr.mxu0 0.0
        %252 = vmatpush1.msra.mxu0 0.0
        %253 = vmatprep.subr.mxu0 0.0
        %254 = vmatpush1.msra.mxu0 0.0
        %255 = vmatprep.subr.mxu0 0.0
        %256 = vmatpush1.msra.mxu0 0.0
        %257 = vmatprep.subr.mxu0 0.0
        %258 = vmatpush1.msra.mxu0 0.0
        %259 = vmatprep.subr.mxu0 0.0
        %260 = vmatpush1.msra.mxu0 0.0
        %261 = vmatprep.subr.mxu0 0.0
        %262 = vmatpush1.msra.mxu0 0.0
        %263 = vmatprep.subr.mxu0 0.0
        %264 = vmatpush1.msra.mxu0 0.0
        %265 = vmatprep.subr.mxu0 0.0
        %266 = vmatpush1.msra.mxu0 0.0
        %267 = vmatprep.subr.mxu0 0.0
        %268 = vmatpush1.msra.mxu0 0.0
        %269 = vmatprep.subr.mxu0 0.0
        %270 = vmatpush1.msra.mxu0 0.0
        %271 = vmatprep.subr.mxu0 0.0
        %272 = vmatpush1.msra.mxu0 0.0
        %273 = vmatprep.subr.mxu0 0.0
        %274 = vmatpush1.msra.mxu0 0.0
        %275 = vmatprep.subr.mxu0 0.0
        %276 = vmatpush1.msra.mxu0 0.0
        %277 = vmatprep.subr.mxu0 0.0
        %278 = vmatpush1.msra.mxu0 0.0
        %279 = vmatprep.subr.mxu0 0.0
        %280 = vmatpush1.msra.mxu0 0.0
        %281 = vmatprep.subr.mxu0 0.0
        %282 = vmatpush1.msra.mxu0 0.0
        %283 = vmatprep.mubr.f32.mxu0 0.0
        %284 = vmatmul.mubr.f32.gmra.mrb[0].mxu0 %v217
        %v285 = vpop.f32.mrb[0].mxu0
        %v286 = vadd.f32 0.0, %v285
        %v287 = vpop.f32.mrb[0].mxu0
        %288 = vdwg.mxu0
        %v289 = vmax.f32 %v286, 0.0
        %v290 = vld [vmem:[%s2] sm:$0x3]
        %vm291 = vcmask 15360
        %v293 = vsel %vm291, %v289, 0
        %vm295 = vcmask 1041408
        %v297 = vsel %vm295, %v290, 0
        %299 = vmatprep.subr.mxu0 0.0
        %300 = vmatpush1.msra.mxu0 %v297
        %301 = vmatprep.subr.mxu0 0.0
        %302 = vmatpush1.msra.mxu0 0.0
        %303 = vmatprep.subr.mxu0 0.0
        %304 = vmatpush1.msra.mxu0 0.0
        %305 = vmatprep.subr.mxu0 0.0
        %306 = vmatpush1.msra.mxu0 0.0
        %307 = vmatprep.subr.mxu0 0.0
        %308 = vmatpush1.msra.mxu0 0.0
        %309 = vmatprep.subr.mxu0 0.0
        %310 = vmatpush1.msra.mxu0 0.0
        %311 = vmatprep.subr.mxu0 0.0
        %312 = vmatpush1.msra.mxu0 0.0
        %313 = vmatprep.subr.mxu0 0.0
        %314 = vmatpush1.msra.mxu0 0.0
        %315 = vmatprep.subr.mxu0 0.0
        %316 = vmatpush1.msra.mxu0 0.0
        %317 = vmatprep.subr.mxu0 0.0
        %318 = vmatpush1.msra.mxu0 0.0
        %319 = vmatprep.subr.mxu0 0.0
        %320 = vmatpush1.msra.mxu0 0.0
        %321 = vmatprep.subr.mxu0 0.0
        %322 = vmatpush1.msra.mxu0 0.0
        %323 = vmatprep.subr.mxu0 0.0
        %324 = vmatpush1.msra.mxu0 0.0
        %325 = vmatprep.subr.mxu0 0.0
        %326 = vmatpush1.msra.mxu0 0.0
        %327 = vmatprep.subr.mxu0 0.0
        %328 = vmatpush1.msra.mxu0 0.0
        %329 = vmatprep.subr.mxu0 0.0
        %330 = vmatpush1.msra.mxu0 0.0
        %331 = vmatprep.subr.mxu0 0.0
        %332 = vmatpush1.msra.mxu0 0.0
        %333 = vmatprep.subr.mxu0 0.0
        %334 = vmatpush1.msra.mxu0 0.0
        %335 = vmatprep.subr.mxu0 0.0
        %336 = vmatpush1.msra.mxu0 0.0
        %337 = vmatprep.subr.mxu0 0.0
        %338 = vmatpush1.msra.mxu0 0.0
        %339 = vmatprep.subr.mxu0 0.0
        %340 = vmatpush1.msra.mxu0 0.0
        %341 = vmatprep.subr.mxu0 0.0
        %342 = vmatpush1.msra.mxu0 0.0
        %343 = vmatprep.subr.mxu0 0.0
        %344 = vmatpush1.msra.mxu0 0.0
        %345 = vmatprep.subr.mxu0 0.0
        %346 = vmatpush1.msra.mxu0 0.0
        %347 = vmatprep.subr.mxu0 0.0
        %348 = vmatpush1.msra.mxu0 0.0
        %349 = vmatprep.subr.mxu0 0.0
        %350 = vmatpush1.msra.mxu0 0.0
        %351 = vmatprep.subr.mxu0 0.0
        %352 = vmatpush1.msra.mxu0 0.0
        %353 = vmatprep.subr.mxu0 0.0
        %354 = vmatpush1.msra.mxu0 0.0
        %355 = vmatprep.subr.mxu0 0.0
        %356 = vmatpush1.msra.mxu0 0.0
        %357 = vmatprep.subr.mxu0 0.0
        %358 = vmatpush1.msra.mxu0 0.0
        %359 = vmatprep.subr.mxu0 0.0
        %360 = vmatpush1.msra.mxu0 0.0
        %361 = vmatprep.subr.mxu0 0.0
        %362 = vmatpush1.msra.mxu0 0.0
        %363 = vmatprep.mubr.f32.mxu0 0.0
        %364 = vmatmul.mubr.f32.gmra.mrb[0].mxu0 %v293
        %v365 = vpop.f32.mrb[0].mxu0
        %v366 = vadd.f32 0.0, %v365
        %v367 = vpop.f32.mrb[0].mxu0
        %368 = vdwg.mxu0
        %v369 = vxor.u32 %v366, 2147483648
        %v370 = vmul.f32 %v369, 1.442695
        %v371 = vpow.pop %v370
        %v372 = vadd.f32 %v371, 1.0
        %v373 = vrcp.pop %v372
        %v374 = vmul.f32 1.0, %v373
        %v375 = vlaneseq
        %v376 = vshrl.u32 %v375, 7
        %v377 = vsub.s32 0, %v376
        %v378 = vrot.slane %v374, %v377
        %380 = vbcast.lane.b32.xlu0 %v378, 256
        %v381 = vpop.permute.xlu0 %380
        %s383 = sor.u32 256, 8
        %384 = vbcast.lane.b32.xlu0 %v378, %s383
        %v385 = vpop.permute.xlu0 %384
        %v386 = vmul.f32 %v189, %v381
        %v387 = vmul.f32 %v190, %v381
        %v388 = vmul.f32 %v191, %v385
        %v389 = vmul.f32 %v192, %v385
        %390 = vst [vmem:[%s188] sm:$0xff] %v386
        %391 = vst [vmem:[%s188 + $0x8] sm:$0xff] %v387
        %392 = vst [vmem:[%s188 + $0x10] sm:$0xff] %v388
        %393 = vst [vmem:[%s188 + $0x18] sm:$0xff] %v389
        %s394 = sand.u32 %s96, 1
        %s395 = scalar_lea.sflag [#allocation4], %s394
        %s396 = sand.u32 %s96, 1
        %s397 = smul.addr %s396, 32
        %s398 = scalar_lea.vmem [#allocation5], %s397
        // Predicated region
        $region37: #{tpu_custom_call.1} parent=31 // pred_check
          %p399 = pneg %p106
        $region38: #{tpu_custom_call.1} parent=31 // pred_check_branch
          %401 = sbr.rel (%p399) target = $region40
        $region39: #{tpu_custom_call.1} parent=31 // pred_region
          %s403 = ssub.s32 512, 512
          %404 = vsyncadd %s395, %s403
          %s405 = smul.addr %s20, 4
          %s406 = smul.addr %s405, 128
          %s407 = scalar_lea.hbm %s3, %s406
          %s408 = sshll.u32 %s398, 4
          %s409 = int_to_ptr.vmem [resolvable:$true] %s408
          %414 = dma.vmem_to_hbm [thread:$0]  %s409, 512, %s407, %s395, 256, 256, 16
        $region40: #{tpu_custom_call.1} parent=31 // pred_fallthru
          _
      $region32: #{tpu_custom_call.1} parent=5 // pred_fallthru
        _
      %p415 = scmp.le.s32.totalorder 2, %s15
      // Predicated region
      $region41: #{tpu_custom_call.1} parent=5 // pred_check
        %p416 = pneg %p415
      $region42: #{tpu_custom_call.1} parent=5 // pred_check_branch
        %418 = sbr.rel (%p416) target = $region44
      $region43: #{tpu_custom_call.1} parent=5 // pred_region
        %s419 = ssub.s32 %s15, 2
        // Predicated region
        $region45: #{tpu_custom_call.1} parent=43 // pred_check
          %p420 = pneg %p112
        $region46: #{tpu_custom_call.1} parent=43 // pred_check_branch
          %422 = sbr.rel (%p420) target = $region48
        $region47: #{tpu_custom_call.1} parent=43 // pred_region
          %s423 = sand.u32 %s97, 1
          %s424 = scalar_lea.sflag [#allocation4], %s423
          %s425 = sand.u32 %s97, 1
          %s426 = smul.addr %s425, 32
          %s427 = scalar_lea.vmem [#allocation5], %s426
          %428 = dma.done %s424, 512
        $region48: #{tpu_custom_call.1} parent=43 // pred_fallthru
          _
      $region44: #{tpu_custom_call.1} parent=5 // pred_fallthru
        _
    $region6: #{tpu_custom_call.1} parent=1 // loop_footer
      %s19 = sadd.s32 1, %s15
    $region7: #{tpu_custom_call.1} parent=1 // loop_footer_branch
      %14 = sbr.rel target = $region3
    $region8: #{tpu_custom_call.1} parent=1 // loop_exit
      _
    %429 = vsyncpa [#allocation3], 1
    %s430 = scalar_lea.sflag [#allocation3], 1
    %431 = vsyncpa %s430, 1
    %432 = vsyncpa [#allocation4], 1
    %s433 = scalar_lea.sflag [#allocation4], 1
    %434 = vsyncpa %s433, 1

</llo_original>
